<compile_context>
chip_gen: v7x
topology: tpu7x:2x2x1
jax: 0.10.0
libtpu: 0.0.40
codegen_flags: <defaults>
</compile_context>

<pallas_src>
import math
import jax
import jax.numpy as jnp
from jax import lax
from jax.experimental import pallas as pl
from jax.experimental.pallas import tpu as pltpu

# ----------------------------- hyper-parameters -----------------------------
VOCAB = 256        # vocab_size
EMB = 64           # embedding_size
ENC_DIM = 64       # enc_dim (== latent_distribution.enc_size)
N_LATENT = 16      # n_latent (topics)
N_COVARS = 8       # categorical covariate values (> 0 -> CovariateModel)
BATCH = 8
OUT_LANES = 128    # lane-dense loss slab: col 0 = KL, col 1 = recon

COV_COLS = N_COVARS + 1                       # one-hot covars + constant-1 column
K_DEC = (N_COVARS + 1) * N_LATENT + COV_COLS  # fused decoder K = 144 + 9 = 153

ALPHA = 1.0
PRIOR_VAR = 1.0 / ALPHA - 2.0 / N_LATENT + 1.0 / (N_LATENT * N_LATENT)
INV_PRIOR_VAR = 1.0 / PRIOR_VAR
PRIOR_LOGVAR = math.log(PRIOR_VAR)
BN_EPS = 1e-3      # nn.BatchNorm1d(..., eps=0.001)

assert EMB == ENC_DIM, "bias-slab packing below assumes embedding_size == enc_dim"


# --------------------------------- kernel -----------------------------------
def _cov_bow_vae_kernel(data_ref, covrep_ref, eps_ref,
                        w_emb_ref, w_enc_ref, w_heads_ref, rep_ref, w_full_ref,
                        enc_slab_ref, head_slab_ref,
                        out_ref):
    data = data_ref[...]          # (B, V)          dense bag-of-words counts
    covrep = covrep_ref[...]      # (B, K_DEC)      [one_hot(cov), 1, repeat(., T)]
    eps = eps_ref[...]            # (B, T)          N(0,1) reparameterization noise

    enc_slab = enc_slab_ref[...]    # (2+COV_COLS, EMB): b_emb, b_enc, w_enc_c(+zero row)
    head_slab = head_slab_ref[...]  # (3, 2T): [b_mu|b_lv], [g_mu|g_lv], [beta_mu|beta_lv]

    # ---- embedding: Linear(vocab, emb) + Tanh ----
    emb = jnp.tanh(
        jnp.dot(data, w_emb_ref[...], preferred_element_type=jnp.float32)
        + enc_slab[0:1, :])

    # ---- encoder: Linear(emb + n_covars, enc_dim) + Softplus ----
    # covariate one-hot columns live at the front of covrep -> no extra input stream
    covext = covrep[:, :COV_COLS]                                   # (B, C+1)
    h = (jnp.dot(emb, w_enc_ref[...], preferred_element_type=jnp.float32)
         + jnp.dot(covext, enc_slab[2:, :], preferred_element_type=jnp.float32)
         + enc_slab[1:2, :])
    # torch.nn.Softplus (beta=1, threshold=20)
    h = jnp.where(h > 20.0, h, jnp.log1p(jnp.exp(jnp.minimum(h, 20.0))))
    # TODO(synk): encoder Dropout / post-sample Dropout treated as identity (eval mode).

    # ---- LogisticGaussianDistribution: fused mu|logvar head + BatchNorm1d ----
    heads = (jnp.dot(h, w_heads_ref[...], preferred_element_type=jnp.float32)
             + head_slab[0:1, :])                                   # (B, 2T)
    m = jnp.mean(heads, axis=0, keepdims=True)
    d = heads - m
    v = jnp.mean(d * d, axis=0, keepdims=True)                      # biased batch var
    heads_bn = head_slab[1:2, :] * d * lax.rsqrt(v + BN_EPS) + head_slab[2:3, :]
    mu_bn = heads_bn[:, :N_LATENT]
    lv_bn = heads_bn[:, N_LATENT:]

    # reparameterized Gaussian sample (std reused for KL)
    s = jnp.exp(0.5 * lv_bn)
    z_p = mu_bn + s * eps

    # KL against logistic-normal prior approximation
    kl = 0.5 * (jnp.sum((s * s + mu_bn * mu_bn) * INV_PRIOR_VAR
                        + PRIOR_LOGVAR - lv_bn,
                        axis=1, keepdims=True) - N_LATENT)

    # z = softmax(z_p) over latent dim (approx reciprocal -> EUP slot)
    zm = jnp.max(z_p, axis=1, keepdims=True)
    ze = jnp.exp(z_p - zm)
    z = ze * pl.reciprocal(jnp.sum(ze, axis=1, keepdims=True), approx=True)

    # ---- fully fused decoder: ONE K=153 MXU matmul ----
    # lhs cols:  [0, C)        -> one_hot(cov)              (pairs with w_cov rows)
    #            C             -> 1                         (pairs with b_dec row)
    #            C+1 + c*T + t -> cov_ext[:, c] * z[:, t]   (pairs with w_int / w_dec)
    # z replication done on the MXU:  zr = z @ R (R constant 0/1), then the
    # first C+1 columns get +1 via an iota mask so lhs = covrep * (zr + pad).
    zr = jnp.dot(z, rep_ref[...], preferred_element_type=jnp.float32)   # (B, K_DEC)
    col = lax.broadcasted_iota(jnp.int32, zr.shape, 1)
    lhs = covrep * (zr + jnp.where(col < COV_COLS, 1.0, 0.0))
    logits = jnp.dot(lhs, w_full_ref[...], preferred_element_type=jnp.float32)  # (B, V)

    # ---- recon via log-softmax identity (y never materialized) ----
    lm = jnp.max(logits, axis=1, keepdims=True)
    shifted = logits - lm
    lse = jnp.log(jnp.sum(jnp.exp(shifted), axis=1, keepdims=True))
    recon = (lse * jnp.sum(data, axis=1, keepdims=True)
             - jnp.sum(data * shifted, axis=1, keepdims=True))

    # ---- single lane-dense output: col 0 = KL, col 1 = recon ----
    ocol = lax.broadcasted_iota(jnp.int32, out_ref.shape, 1)
    out_ref[...] = jnp.where(ocol == 0, kl, jnp.where(ocol == 1, recon, 0.0))


# -------------------------------- wrapper ------------------------------------
def _full_spec(shape):
    ndim = len(shape)
    return pl.BlockSpec(shape, lambda i, _n=ndim: (0,) * _n)


def pack_params(params):
    """One-time packing of kernel-ready weight slabs (hoisted out of the call path)."""
    w_heads = jnp.concatenate([params["w_mu"], params["w_lv"]], axis=1)         # (ENC, 2T)
    # fused decoder weight: [w_cov ; b_dec ; w_int(flat) ; w_dec]  -> (K_DEC, V)
    w_full = jnp.concatenate(
        [params["w_cov"], params["b_dec"],
         params["w_int"].reshape(N_COVARS * N_LATENT, VOCAB), params["w_dec"]],
        axis=0)
    # encoder bias slab: row0 = b_emb, row1 = b_enc, rows 2.. = w_enc_c (+ zero row
    # pairing with the constant-1 column of covext)
    w_enc_c_ext = jnp.concatenate(
        [params["w_enc_c"], jnp.zeros((1, ENC_DIM), jnp.float32)], axis=0)      # (C+1, ENC)
    enc_slab = jnp.concatenate([params["b_emb"], params["b_enc"], w_enc_c_ext], axis=0)
    head_slab = jnp.concatenate(
        [jnp.concatenate([params["b_mu"], params["b_lv"]], axis=1),
         jnp.concatenate([params["g_mu"], params["g_lv"]], axis=1),
         jnp.concatenate([params["beta_mu"], params["beta_lv"]], axis=1)],
        axis=0)                                                                 # (3, 2T)
    # z replication matrix: R[t, COV_COLS + c*T + t] = 1 for all c
    eye = jnp.eye(N_LATENT, dtype=jnp.float32)
    rep_mat = jnp.concatenate(
        [jnp.zeros((N_LATENT, COV_COLS), jnp.float32),
         jnp.tile(eye, (1, N_COVARS + 1))], axis=1)                             # (T, K_DEC)
    # TODO(synk): at production scale store w_emb / w_full as bf16 (MXU-rate /
    # bandwidth win) after re-validating tolerances against the f32 reference.
    return {"w_emb": params["w_emb"], "w_enc_e": params["w_enc_e"],
            "w_heads": w_heads, "rep_mat": rep_mat, "w_full": w_full,
            "enc_slab": enc_slab, "head_slab": head_slab}


def covariate_bow_vae_forward(data, covars_int, eps, packed):
    """Mirrors CovariateBowVAEModel.forward(F, data, covars)."""
    batch = data.shape[0]
    covars_oh = jax.nn.one_hot(covars_int, N_COVARS, dtype=jnp.float32)
    covext = jnp.concatenate([covars_oh, jnp.ones((batch, 1), jnp.float32)], axis=1)
    # [covext | covext repeated per topic]  -> (B, K_DEC); tiny, per-call only
    covrep = jnp.concatenate([covext, jnp.repeat(covext, N_LATENT, axis=1)], axis=1)

    inputs = (data, covrep, eps,
              packed["w_emb"], packed["w_enc_e"], packed["w_heads"],
              packed["rep_mat"], packed["w_full"],
              packed["enc_slab"], packed["head_slab"])

    # TODO(synk): batch kept as a single block because BatchNorm1d uses batch
    # statistics; for production, split the kernel at the BN boundary (tiny
    # (B,2T) heads slab stays resident) so the decoder/recon stage can grid
    # over batch tiles marked "parallel" (v7x 2-TC sharding, batch pipelining).
    # TODO(synk): at realistic vocab (20k-50k) add a vocab grid axis (K-tile
    # w_emb/data, N-tile w_full with a streaming LSE for recon), keep weight
    # BlockSpecs resident via constant index_maps, and set vmem_limit_bytes.
    out = pl.pallas_call(
        _cov_bow_vae_kernel,
        out_shape=jax.ShapeDtypeStruct((batch, OUT_LANES), jnp.float32),
        grid=(1,),
        in_specs=[_full_spec(x.shape) for x in inputs],
        out_specs=_full_spec((batch, OUT_LANES)),
        compiler_params=pltpu.CompilerParams(
            dimension_semantics=("arbitrary",)),
    )(*inputs)

    kl = out[:, 0]
    recon = out[:, 1]
    ii = kl + recon
    coherence_loss = jnp.zeros_like(ii)    # coherence_reg_penalty == 0.0
    redundancy_loss = jnp.zeros_like(ii)
    return ii, kl, recon, coherence_loss, redundancy_loss, None


# --------------------------- parameter initialization ------------------------
def init_params(key):
    ks = jax.random.split(key, 10)

    def xavier(k, shape):  # xavier_uniform_ (fan_in + fan_out identical either layout)
        limit = math.sqrt(6.0 / (shape[0] + shape[1]))
        return jax.random.uniform(k, shape, jnp.float32, -limit, limit)

    p = {}
    p["w_emb"] = xavier(ks[0], (VOCAB, EMB))
    p["b_emb"] = jnp.zeros((1, EMB), jnp.float32)

    w_enc = xavier(ks[1], (EMB + N_COVARS, ENC_DIM))
    p["w_enc_e"] = w_enc[:EMB]
    p["w_enc_c"] = w_enc[EMB:]
    p["b_enc"] = jnp.zeros((1, ENC_DIM), jnp.float32)

    p["w_mu"] = xavier(ks[2], (ENC_DIM, N_LATENT))
    p["b_mu"] = jnp.zeros((1, N_LATENT), jnp.float32)
    p["g_mu"] = jnp.ones((1, N_LATENT), jnp.float32)
    p["beta_mu"] = jnp.zeros((1, N_LATENT), jnp.float32)

    p["w_lv"] = xavier(ks[3], (ENC_DIM, N_LATENT))
    p["b_lv"] = jnp.zeros((1, N_LATENT), jnp.float32)
    p["g_lv"] = jnp.ones((1, N_LATENT), jnp.float32)
    p["beta_lv"] = jnp.zeros((1, N_LATENT), jnp.float32)

    p["w_dec"] = xavier(ks[4], (N_LATENT, VOCAB))
    p["b_dec"] = 0.01 * jax.random.normal(ks[5], (1, VOCAB), jnp.float32)

    p["w_cov"] = xavier(ks[6], (N_COVARS, VOCAB))
    w_int_flat = xavier(ks[7], (N_COVARS * N_LATENT, VOCAB))
    p["w_int"] = w_int_flat.reshape(N_COVARS, N_LATENT, VOCAB)
    return p


# ------------------------------ pure-JAX reference ---------------------------
def reference_forward(data, covars_int, eps, p):
    covars = jax.nn.one_hot(covars_int, N_COVARS, dtype=jnp.float32)
    emb = jnp.tanh(data @ p["w_emb"] + p["b_emb"])
    co_emb = jnp.concatenate([emb, covars], axis=1)
    w_enc = jnp.concatenate([p["w_enc_e"], p["w_enc_c"]], axis=0)
    h = jax.nn.softplus(co_emb @ w_enc + p["b_enc"])
    mu = h @ p["w_mu"] + p["b_mu"]
    lv = h @ p["w_lv"] + p["b_lv"]

    def bn(x, g, b):
        m = x.mean(0, keepdims=True)
        v = ((x - m) ** 2).mean(0, keepdims=True)
        return g * (x - m) / jnp.sqrt(v + BN_EPS) + b

    mu_bn = bn(mu, p["g_mu"], p["beta_mu"])
    lv_bn = bn(lv, p["g_lv"], p["beta_lv"])
    z_p = mu_bn + jnp.exp(0.5 * lv_bn) * eps
    kl = 0.5 * (jnp.sum(jnp.exp(lv_bn) / PRIOR_VAR + mu_bn ** 2 / PRIOR_VAR
                        + PRIOR_LOGVAR - lv_bn, axis=1) - N_LATENT)
    z = jax.nn.softmax(z_p, axis=1)
    dec = z @ p["w_dec"] + p["b_dec"]
    score_c = covars @ p["w_cov"]
    inter = (covars[:, :, None] * z[:, None, :]).reshape(data.shape[0], -1)
    score_ci = inter @ p["w_int"].reshape(N_COVARS * N_LATENT, VOCAB)
    y = jax.nn.softmax(dec + score_c + score_ci, axis=1)
    recon = -jnp.sum(data * jnp.log(y + 1e-12), axis=1)
    return kl + recon, kl, recon


# ----------------------------------- main ------------------------------------
if __name__ == "__main__":
    key = jax.random.PRNGKey(0)
    k_data, k_cov, k_eps, k_params = jax.random.split(key, 4)

    # dense bag-of-words counts (B, V)
    data = jnp.floor(jax.random.uniform(k_data, (BATCH, VOCAB)) * 3.0).astype(jnp.float32)
    covars_int = jax.random.randint(k_cov, (BATCH,), 0, N_COVARS)
    eps = jax.random.normal(k_eps, (BATCH, N_LATENT), jnp.float32)
    params = init_params(k_params)
    packed = pack_params(params)            # packed ONCE, outside the call path

    ii, kl, recon, coh, red, clf = covariate_bow_vae_forward(data, covars_int, eps, packed)
    jax.block_until_ready((ii, kl, recon))

    ii_ref, kl_ref, recon_ref = reference_forward(data, covars_int, eps, params)
    assert jnp.allclose(kl, kl_ref, rtol=1e-4, atol=1e-4), (kl, kl_ref)
    assert jnp.allclose(recon, recon_ref, rtol=1e-4, atol=1e-4), (recon, recon_ref)
    assert jnp.allclose(ii, ii_ref, rtol=1e-4, atol=1e-4), (ii, ii_ref)
    assert clf is None

    print("KERNEL_OK")
</pallas_src>

<mosaic_0001>
module attributes {stable_mosaic.version = 11 : i64} {
  func.func @_cov_bow_vae_kernel(%arg0: i32, %arg1: memref<8x256xf32, #tpu.memory_space<vmem>>, %arg2: memref<8x153xf32, #tpu.memory_space<vmem>>, %arg3: memref<8x16xf32, #tpu.memory_space<vmem>>, %arg4: memref<256x64xf32, #tpu.memory_space<vmem>>, %arg5: memref<64x64xf32, #tpu.memory_space<vmem>>, %arg6: memref<64x32xf32, #tpu.memory_space<vmem>>, %arg7: memref<16x153xf32, #tpu.memory_space<vmem>>, %arg8: memref<153x256xf32, #tpu.memory_space<vmem>>, %arg9: memref<11x64xf32, #tpu.memory_space<vmem>>, %arg10: memref<3x32xf32, #tpu.memory_space<vmem>>, %arg11: memref<8x128xf32, #tpu.memory_space<vmem>>) attributes {dimension_semantics = [#tpu.dimension_semantics<arbitrary>], iteration_bounds = array<i64: 1>, scalar_prefetch = 0 : i64, scratch_operands = 0 : i64, tpu.core_type = #tpu.core_type<tc>, window_params = [{pipeline_mode = #tpu.pipeline_mode<synchronous>, transform_indices = @transform_0, window_bounds = array<i64: 8, 256>}, {pipeline_mode = #tpu.pipeline_mode<synchronous>, transform_indices = @transform_1, window_bounds = array<i64: 8, 153>}, {pipeline_mode = #tpu.pipeline_mode<synchronous>, transform_indices = @transform_2, window_bounds = array<i64: 8, 16>}, {pipeline_mode = #tpu.pipeline_mode<synchronous>, transform_indices = @transform_3, window_bounds = array<i64: 256, 64>}, {pipeline_mode = #tpu.pipeline_mode<synchronous>, transform_indices = @transform_4, window_bounds = array<i64: 64, 64>}, {pipeline_mode = #tpu.pipeline_mode<synchronous>, transform_indices = @transform_5, window_bounds = array<i64: 64, 32>}, {pipeline_mode = #tpu.pipeline_mode<synchronous>, transform_indices = @transform_6, window_bounds = array<i64: 16, 153>}, {pipeline_mode = #tpu.pipeline_mode<synchronous>, transform_indices = @transform_7, window_bounds = array<i64: 153, 256>}, {pipeline_mode = #tpu.pipeline_mode<synchronous>, transform_indices = @transform_8, window_bounds = array<i64: 11, 64>}, {pipeline_mode = #tpu.pipeline_mode<synchronous>, transform_indices = @transform_9, window_bounds = array<i64: 3, 32>}, {pipeline_mode = #tpu.pipeline_mode<synchronous>, transform_indices = @transform_10, window_bounds = array<i64: 8, 128>}]} {
    %c0 = arith.constant 0 : index
    %c0_0 = arith.constant 0 : index
    %0 = vector.load %arg1[%c0, %c0_0] : memref<8x256xf32, #tpu.memory_space<vmem>>, vector<8x256xf32>
    %c0_1 = arith.constant 0 : index
    %c0_2 = arith.constant 0 : index
    %1 = vector.load %arg2[%c0_1, %c0_2] : memref<8x153xf32, #tpu.memory_space<vmem>>, vector<8x153xf32>
    %c0_3 = arith.constant 0 : index
    %c0_4 = arith.constant 0 : index
    %2 = vector.load %arg3[%c0_3, %c0_4] : memref<8x16xf32, #tpu.memory_space<vmem>>, vector<8x16xf32>
    %c0_5 = arith.constant 0 : index
    %c0_6 = arith.constant 0 : index
    %3 = vector.load %arg9[%c0_5, %c0_6] : memref<11x64xf32, #tpu.memory_space<vmem>>, vector<11x64xf32>
    %c0_7 = arith.constant 0 : index
    %c0_8 = arith.constant 0 : index
    %4 = vector.load %arg10[%c0_7, %c0_8] : memref<3x32xf32, #tpu.memory_space<vmem>>, vector<3x32xf32>
    %c0_9 = arith.constant 0 : index
    %c0_10 = arith.constant 0 : index
    %5 = vector.load %arg4[%c0_9, %c0_10] : memref<256x64xf32, #tpu.memory_space<vmem>>, vector<256x64xf32>
    %cst = arith.constant dense<0.000000e+00> : vector<8x64xf32>
    %6 = tpu.matmul %0, %5, %cst {dimension_numbers = #tpu.dot_dimension_numbers<[1], [0], [0], [1], [0, 0, 1, 1], [], []>} : vector<8x256xf32>, vector<256x64xf32>, vector<8x64xf32> -> vector<8x64xf32>
    %7 = vector.extract_strided_slice %3 {offsets = [0, 0], sizes = [1, 64], strides = [1, 1]} : vector<11x64xf32> to vector<1x64xf32>
    %8 = vector.broadcast %7 : vector<1x64xf32> to vector<8x64xf32>
    %9 = arith.addf %6, %8 : vector<8x64xf32>
    %10 = math.tanh %9 : vector<8x64xf32>
    %11 = vector.extract_strided_slice %1 {offsets = [0, 0], sizes = [8, 9], strides = [1, 1]} : vector<8x153xf32> to vector<8x9xf32>
    %c0_11 = arith.constant 0 : index
    %c0_12 = arith.constant 0 : index
    %12 = vector.load %arg5[%c0_11, %c0_12] : memref<64x64xf32, #tpu.memory_space<vmem>>, vector<64x64xf32>
    %cst_13 = arith.constant dense<0.000000e+00> : vector<8x64xf32>
    %13 = tpu.matmul %10, %12, %cst_13 {dimension_numbers = #tpu.dot_dimension_numbers<[1], [0], [0], [1], [0, 0, 1, 1], [], []>} : vector<8x64xf32>, vector<64x64xf32>, vector<8x64xf32> -> vector<8x64xf32>
    %14 = vector.extract_strided_slice %3 {offsets = [2, 0], sizes = [9, 64], strides = [1, 1]} : vector<11x64xf32> to vector<9x64xf32>
    %cst_14 = arith.constant dense<0.000000e+00> : vector<8x64xf32>
    %15 = tpu.matmul %11, %14, %cst_14 {dimension_numbers = #tpu.dot_dimension_numbers<[1], [0], [0], [1], [0, 0, 1, 1], [], []>} : vector<8x9xf32>, vector<9x64xf32>, vector<8x64xf32> -> vector<8x64xf32>
    %16 = arith.addf %13, %15 : vector<8x64xf32>
    %17 = vector.extract_strided_slice %3 {offsets = [1, 0], sizes = [1, 64], strides = [1, 1]} : vector<11x64xf32> to vector<1x64xf32>
    %18 = vector.broadcast %17 : vector<1x64xf32> to vector<8x64xf32>
    %19 = arith.addf %16, %18 : vector<8x64xf32>
    %cst_15 = arith.constant 2.000000e+01 : f32
    %20 = vector.broadcast %cst_15 : f32 to vector<8x64xf32>
    %21 = arith.cmpf ogt, %19, %20 : vector<8x64xf32>
    %cst_16 = arith.constant 2.000000e+01 : f32
    %22 = vector.broadcast %cst_16 : f32 to vector<8x64xf32>
    %23 = arith.minimumf %19, %22 : vector<8x64xf32>
    %24 = math.exp %23 : vector<8x64xf32>
    %25 = math.log1p %24 : vector<8x64xf32>
    %26 = arith.select %21, %19, %25 : vector<8x64xi1>, vector<8x64xf32>
    %c0_17 = arith.constant 0 : index
    %c0_18 = arith.constant 0 : index
    %27 = vector.load %arg6[%c0_17, %c0_18] : memref<64x32xf32, #tpu.memory_space<vmem>>, vector<64x32xf32>
    %cst_19 = arith.constant dense<0.000000e+00> : vector<8x32xf32>
    %28 = tpu.matmul %26, %27, %cst_19 {dimension_numbers = #tpu.dot_dimension_numbers<[1], [0], [0], [1], [0, 0, 1, 1], [], []>} : vector<8x64xf32>, vector<64x32xf32>, vector<8x32xf32> -> vector<8x32xf32>
    %29 = vector.extract_strided_slice %4 {offsets = [0, 0], sizes = [1, 32], strides = [1, 1]} : vector<3x32xf32> to vector<1x32xf32>
    %30 = vector.broadcast %29 : vector<1x32xf32> to vector<8x32xf32>
    %31 = arith.addf %28, %30 : vector<8x32xf32>
    %cst_20 = arith.constant dense<0.000000e+00> : vector<32xf32>
    %32 = vector.multi_reduction <add>, %31, %cst_20 [0] : vector<8x32xf32> to vector<32xf32>
    %33 = vector.shape_cast %32 : vector<32xf32> to vector<1x32xf32>
    %cst_21 = arith.constant 8.000000e+00 : f32
    %34 = vector.broadcast %cst_21 : f32 to vector<1x32xf32>
    %35 = arith.divf %33, %34 : vector<1x32xf32>
    %36 = vector.broadcast %35 : vector<1x32xf32> to vector<8x32xf32>
    %37 = arith.subf %31, %36 : vector<8x32xf32>
    %38 = arith.mulf %37, %37 : vector<8x32xf32>
    %cst_22 = arith.constant dense<0.000000e+00> : vector<32xf32>
    %39 = vector.multi_reduction <add>, %38, %cst_22 [0] : vector<8x32xf32> to vector<32xf32>
    %40 = vector.shape_cast %39 : vector<32xf32> to vector<1x32xf32>
    %cst_23 = arith.constant 8.000000e+00 : f32
    %41 = vector.broadcast %cst_23 : f32 to vector<1x32xf32>
    %42 = arith.divf %40, %41 : vector<1x32xf32>
    %43 = vector.extract_strided_slice %4 {offsets = [1, 0], sizes = [1, 32], strides = [1, 1]} : vector<3x32xf32> to vector<1x32xf32>
    %44 = vector.broadcast %43 : vector<1x32xf32> to vector<8x32xf32>
    %45 = arith.mulf %44, %37 : vector<8x32xf32>
    %cst_24 = arith.constant 1.000000e-03 : f32
    %46 = vector.broadcast %cst_24 : f32 to vector<1x32xf32>
    %47 = arith.addf %42, %46 : vector<1x32xf32>
    %48 = math.rsqrt %47 : vector<1x32xf32>
    %49 = vector.broadcast %48 : vector<1x32xf32> to vector<8x32xf32>
    %50 = arith.mulf %45, %49 : vector<8x32xf32>
    %51 = vector.extract_strided_slice %4 {offsets = [2, 0], sizes = [1, 32], strides = [1, 1]} : vector<3x32xf32> to vector<1x32xf32>
    %52 = vector.broadcast %51 : vector<1x32xf32> to vector<8x32xf32>
    %53 = arith.addf %50, %52 : vector<8x32xf32>
    %54 = vector.extract_strided_slice %53 {offsets = [0, 0], sizes = [8, 16], strides = [1, 1]} : vector<8x32xf32> to vector<8x16xf32>
    %55 = vector.extract_strided_slice %53 {offsets = [0, 16], sizes = [8, 16], strides = [1, 1]} : vector<8x32xf32> to vector<8x16xf32>
    %cst_25 = arith.constant 5.000000e-01 : f32
    %56 = vector.broadcast %cst_25 : f32 to vector<8x16xf32>
    %57 = arith.mulf %56, %55 : vector<8x16xf32>
    %58 = math.exp %57 : vector<8x16xf32>
    %59 = arith.mulf %58, %2 : vector<8x16xf32>
    %60 = arith.addf %54, %59 : vector<8x16xf32>
    %61 = arith.mulf %58, %58 : vector<8x16xf32>
    %62 = arith.mulf %54, %54 : vector<8x16xf32>
    %63 = arith.addf %61, %62 : vector<8x16xf32>
    %cst_26 = arith.constant 1.13777781 : f32
    %64 = vector.broadcast %cst_26 : f32 to vector<8x16xf32>
    %65 = arith.mulf %63, %64 : vector<8x16xf32>
    %cst_27 = arith.constant -0.129077047 : f32
    %66 = vector.broadcast %cst_27 : f32 to vector<8x16xf32>
    %67 = arith.addf %65, %66 : vector<8x16xf32>
    %68 = arith.subf %67, %55 : vector<8x16xf32>
    %cst_28 = arith.constant dense<0.000000e+00> : vector<8xf32>
    %69 = vector.multi_reduction <add>, %68, %cst_28 [1] : vector<8x16xf32> to vector<8xf32>
    %70 = vector.shape_cast %69 : vector<8xf32> to vector<8x1xf32>
    %cst_29 = arith.constant 1.600000e+01 : f32
    %71 = vector.broadcast %cst_29 : f32 to vector<8x1xf32>
    %72 = arith.subf %70, %71 : vector<8x1xf32>
    %cst_30 = arith.constant 5.000000e-01 : f32
    %73 = vector.broadcast %cst_30 : f32 to vector<8x1xf32>
    %74 = arith.mulf %73, %72 : vector<8x1xf32>
    %cst_31 = arith.constant dense<0xFF800000> : vector<8xf32>
    %75 = vector.multi_reduction <maximumf>, %60, %cst_31 [1] : vector<8x16xf32> to vector<8xf32>
    %76 = vector.shape_cast %75 : vector<8xf32> to vector<8x1xf32>
    %77 = vector.broadcast %76 : vector<8x1xf32> to vector<8x16xf32>
    %78 = arith.subf %60, %77 : vector<8x16xf32>
    %79 = math.exp %78 : vector<8x16xf32>
    %cst_32 = arith.constant dense<0.000000e+00> : vector<8xf32>
    %80 = vector.multi_reduction <add>, %79, %cst_32 [1] : vector<8x16xf32> to vector<8xf32>
    %81 = vector.shape_cast %80 : vector<8xf32> to vector<8x1xf32>
    %82 = tpu.reciprocal %81 {approx = true} : vector<8x1xf32> -> vector<8x1xf32>
    %83 = vector.broadcast %82 : vector<8x1xf32> to vector<8x16xf32>
    %84 = arith.mulf %79, %83 : vector<8x16xf32>
    %c0_33 = arith.constant 0 : index
    %c0_34 = arith.constant 0 : index
    %85 = vector.load %arg7[%c0_33, %c0_34] : memref<16x153xf32, #tpu.memory_space<vmem>>, vector<16x153xf32>
    %cst_35 = arith.constant dense<0.000000e+00> : vector<8x153xf32>
    %86 = tpu.matmul %84, %85, %cst_35 {dimension_numbers = #tpu.dot_dimension_numbers<[1], [0], [0], [1], [0, 0, 1, 1], [], []>} : vector<8x16xf32>, vector<16x153xf32>, vector<8x153xf32> -> vector<8x153xf32>
    %87 = tpu.iota {dimensions = array<i32: 1>} : vector<8x153xi32>
    %c9_i32 = arith.constant 9 : i32
    %88 = vector.broadcast %c9_i32 : i32 to vector<8x153xi32>
    %89 = arith.cmpi slt, %87, %88 : vector<8x153xi32>
    %cst_36 = arith.constant 1.000000e+00 : f32
    %cst_37 = arith.constant 0.000000e+00 : f32
    %90 = vector.broadcast %cst_36 : f32 to vector<8x153xf32>
    %91 = vector.broadcast %cst_37 : f32 to vector<8x153xf32>
    %92 = arith.select %89, %90, %91 : vector<8x153xi1>, vector<8x153xf32>
    %93 = arith.addf %86, %92 : vector<8x153xf32>
    %94 = arith.mulf %1, %93 : vector<8x153xf32>
    %c0_38 = arith.constant 0 : index
    %c0_39 = arith.constant 0 : index
    %95 = vector.load %arg8[%c0_38, %c0_39] : memref<153x256xf32, #tpu.memory_space<vmem>>, vector<153x256xf32>
    %cst_40 = arith.constant dense<0.000000e+00> : vector<8x256xf32>
    %96 = tpu.matmul %94, %95, %cst_40 {dimension_numbers = #tpu.dot_dimension_numbers<[1], [0], [0], [1], [0, 0, 1, 1], [], []>} : vector<8x153xf32>, vector<153x256xf32>, vector<8x256xf32> -> vector<8x256xf32>
    %cst_41 = arith.constant dense<0xFF800000> : vector<8xf32>
    %97 = vector.multi_reduction <maximumf>, %96, %cst_41 [1] : vector<8x256xf32> to vector<8xf32>
    %98 = vector.shape_cast %97 : vector<8xf32> to vector<8x1xf32>
    %99 = vector.broadcast %98 : vector<8x1xf32> to vector<8x256xf32>
    %100 = arith.subf %96, %99 : vector<8x256xf32>
    %101 = math.exp %100 : vector<8x256xf32>
    %cst_42 = arith.constant dense<0.000000e+00> : vector<8xf32>
    %102 = vector.multi_reduction <add>, %101, %cst_42 [1] : vector<8x256xf32> to vector<8xf32>
    %103 = vector.shape_cast %102 : vector<8xf32> to vector<8x1xf32>
    %104 = math.log %103 : vector<8x1xf32>
    %cst_43 = arith.constant dense<0.000000e+00> : vector<8xf32>
    %105 = vector.multi_reduction <add>, %0, %cst_43 [1] : vector<8x256xf32> to vector<8xf32>
    %106 = vector.shape_cast %105 : vector<8xf32> to vector<8x1xf32>
    %107 = arith.mulf %104, %106 : vector<8x1xf32>
    %108 = arith.mulf %0, %100 : vector<8x256xf32>
    %cst_44 = arith.constant dense<0.000000e+00> : vector<8xf32>
    %109 = vector.multi_reduction <add>, %108, %cst_44 [1] : vector<8x256xf32> to vector<8xf32>
    %110 = vector.shape_cast %109 : vector<8xf32> to vector<8x1xf32>
    %111 = arith.subf %107, %110 : vector<8x1xf32>
    %112 = tpu.iota {dimensions = array<i32: 1>} : vector<8x128xi32>
    %c0_i32 = arith.constant 0 : i32
    %113 = vector.broadcast %c0_i32 : i32 to vector<8x128xi32>
    %114 = arith.cmpi eq, %112, %113 : vector<8x128xi32>
    %c1_i32 = arith.constant 1 : i32
    %115 = vector.broadcast %c1_i32 : i32 to vector<8x128xi32>
    %116 = arith.cmpi eq, %112, %115 : vector<8x128xi32>
    %cst_45 = arith.constant 0.000000e+00 : f32
    %117 = vector.shape_cast %111 : vector<8x1xf32> to vector<8x1xf32>
    %118 = vector.broadcast %117 : vector<8x1xf32> to vector<8x128xf32>
    %119 = vector.broadcast %cst_45 : f32 to vector<8x128xf32>
    %120 = arith.select %116, %118, %119 : vector<8x128xi1>, vector<8x128xf32>
    %121 = vector.shape_cast %74 : vector<8x1xf32> to vector<8x1xf32>
    %122 = vector.broadcast %121 : vector<8x1xf32> to vector<8x128xf32>
    %123 = arith.select %114, %122, %120 : vector<8x128xi1>, vector<8x128xf32>
    %c0_46 = arith.constant 0 : index
    %c0_47 = arith.constant 0 : index
    %124 = vector.load %arg11[%c0_46, %c0_47] : memref<8x128xf32, #tpu.memory_space<vmem>>, vector<8x128xf32>
    tpu.vector_store %arg11[%c0_46, %c0_47], %123 {strides = array<i32>} : memref<8x128xf32, #tpu.memory_space<vmem>>, vector<8x128xf32>,
    return
  }
  func.func @transform_0(%arg0: i32) -> (i32, i32) {
    %c0_i32 = arith.constant 0 : i32
    %c0_i32_0 = arith.constant 0 : i32
    %c0_i32_1 = arith.constant 0 : i32
    return %c0_i32, %c0_i32_0 : i32, i32
  }
  func.func @transform_1(%arg0: i32) -> (i32, i32) {
    %c0_i32 = arith.constant 0 : i32
    %c0_i32_0 = arith.constant 0 : i32
    %c0_i32_1 = arith.constant 0 : i32
    return %c0_i32, %c0_i32_0 : i32, i32
  }
  func.func @transform_2(%arg0: i32) -> (i32, i32) {
    %c0_i32 = arith.constant 0 : i32
    %c0_i32_0 = arith.constant 0 : i32
    %c0_i32_1 = arith.constant 0 : i32
    return %c0_i32, %c0_i32_0 : i32, i32
  }
  func.func @transform_3(%arg0: i32) -> (i32, i32) {
    %c0_i32 = arith.constant 0 : i32
    %c0_i32_0 = arith.constant 0 : i32
    %c0_i32_1 = arith.constant 0 : i32
    return %c0_i32, %c0_i32_0 : i32, i32
  }
  func.func @transform_4(%arg0: i32) -> (i32, i32) {
    %c0_i32 = arith.constant 0 : i32
    %c0_i32_0 = arith.constant 0 : i32
    %c0_i32_1 = arith.constant 0 : i32
    return %c0_i32, %c0_i32_0 : i32, i32
  }
  func.func @transform_5(%arg0: i32) -> (i32, i32) {
    %c0_i32 = arith.constant 0 : i32
    %c0_i32_0 = arith.constant 0 : i32
    %c0_i32_1 = arith.constant 0 : i32
    return %c0_i32, %c0_i32_0 : i32, i32
  }
  func.func @transform_6(%arg0: i32) -> (i32, i32) {
    %c0_i32 = arith.constant 0 : i32
    %c0_i32_0 = arith.constant 0 : i32
    %c0_i32_1 = arith.constant 0 : i32
    return %c0_i32, %c0_i32_0 : i32, i32
  }
  func.func @transform_7(%arg0: i32) -> (i32, i32) {
    %c0_i32 = arith.constant 0 : i32
    %c0_i32_0 = arith.constant 0 : i32
    %c0_i32_1 = arith.constant 0 : i32
    return %c0_i32, %c0_i32_0 : i32, i32
  }
  func.func @transform_8(%arg0: i32) -> (i32, i32) {
    %c0_i32 = arith.constant 0 : i32
    %c0_i32_0 = arith.constant 0 : i32
    %c0_i32_1 = arith.constant 0 : i32
    return %c0_i32, %c0_i32_0 : i32, i32
  }
  func.func @transform_9(%arg0: i32) -> (i32, i32) {
    %c0_i32 = arith.constant 0 : i32
    %c0_i32_0 = arith.constant 0 : i32
    %c0_i32_1 = arith.constant 0 : i32
    return %c0_i32, %c0_i32_0 : i32, i32
  }
  func.func @transform_10(%arg0: i32) -> (i32, i32) {
    %c0_i32 = arith.constant 0 : i32
    %c0_i32_0 = arith.constant 0 : i32
    %c0_i32_1 = arith.constant 0 : i32
    return %c0_i32, %c0_i32_0 : i32, i32
  }
}

</mosaic_0001>

<llo_original>
// kernel: tpu_custom_call.1
$region0: #{tpu_custom_call.1}
  #allocation0 [shape = 'u32[]', space=smem, size = 0x4, offset = 0x4, fixed_abs, tag = 'smem constant byte address 0x4 - core index']
  #allocation1 [shape = 'u32[144,128]{1,0:T(1,128)}', space=vmem, size = 0x12000, scoped, tag = 'internal scratch']
  %s0 = inlined_call_operand.vmem [shape: f32[8,256], index: 0, kind: input, shape index: {}]
  %s1 = inlined_call_operand.vmem [shape: f32[8,153], index: 1, kind: input, shape index: {}]
  %s2 = inlined_call_operand.vmem [shape: f32[8,16], index: 2, kind: input, shape index: {}]
  %s3 = inlined_call_operand.vmem [shape: f32[256,64], index: 3, kind: input, shape index: {}]
  %s4 = inlined_call_operand.vmem [shape: f32[64,64], index: 4, kind: input, shape index: {}]
  %s5 = inlined_call_operand.vmem [shape: f32[64,32], index: 5, kind: input, shape index: {}]
  %s6 = inlined_call_operand.vmem [shape: f32[16,153], index: 6, kind: input, shape index: {}]
  %s7 = inlined_call_operand.vmem [shape: f32[153,256], index: 7, kind: input, shape index: {}]
  %s8 = inlined_call_operand.vmem [shape: f32[11,64], index: 8, kind: input, shape index: {}]
  %s9 = inlined_call_operand.vmem [shape: f32[3,32], index: 9, kind: input, shape index: {}]
  %s10 = inlined_call_operand.hbm [shape: f32[8,128], index: 10, kind: output, shape index: {}]
  %s11 = sld [smem:[#allocation0]]
  $region50: #{tpu_custom_call.1} parent=0
    _
  %s13 = ssub.s32 1, %s11
  %s14 = scalar_select 0, %s13, %s11
  $region1: #{tpu_custom_call.1} parent=0
    #allocation2 [shape = 'u8[4096]{0}', space=vmem, size = 0x1000, scoped, tag = 'output window, operand 0, single buffered']
    #allocation3 [shape = 's32[1]{0}', space=sflag, size = 0x4, scoped, tag = 'scoped memory for tpu_custom_call.1']
    %15 = vsyncpa [#allocation3], 0
    // Predicated region
    $region2: #{tpu_custom_call.1} parent=1 // pred_check
      _
    $region3: #{tpu_custom_call.1} parent=1 // pred_check_branch
      %17 = sbr.rel (0) target = $region5
    $region4: #{tpu_custom_call.1} parent=1 // pred_region
      _
    $region5: #{tpu_custom_call.1} parent=1 // pred_fallthru
      _
    // Predicated region
    $region6: #{tpu_custom_call.1} parent=1 // pred_check
      _
    $region7: #{tpu_custom_call.1} parent=1 // pred_check_branch
      %19 = sbr.rel (0) target = $region9
    $region8: #{tpu_custom_call.1} parent=1 // pred_region
      _
    $region9: #{tpu_custom_call.1} parent=1 // pred_fallthru
      _
    // Predicated region
    $region10: #{tpu_custom_call.1} parent=1 // pred_check
      _
    $region11: #{tpu_custom_call.1} parent=1 // pred_check_branch
      %21 = sbr.rel (0) target = $region13
    $region12: #{tpu_custom_call.1} parent=1 // pred_region
      _
    $region13: #{tpu_custom_call.1} parent=1 // pred_fallthru
      _
    // Predicated region
    $region14: #{tpu_custom_call.1} parent=1 // pred_check
      _
    $region15: #{tpu_custom_call.1} parent=1 // pred_check_branch
      %23 = sbr.rel (0) target = $region17
    $region16: #{tpu_custom_call.1} parent=1 // pred_region
      _
    $region17: #{tpu_custom_call.1} parent=1 // pred_fallthru
      _
    // Predicated region
    $region18: #{tpu_custom_call.1} parent=1 // pred_check
      _
    $region19: #{tpu_custom_call.1} parent=1 // pred_check_branch
      %25 = sbr.rel (0) target = $region21
    $region20: #{tpu_custom_call.1} parent=1 // pred_region
      _
    $region21: #{tpu_custom_call.1} parent=1 // pred_fallthru
      _
    // Predicated region
    $region22: #{tpu_custom_call.1} parent=1 // pred_check
      _
    $region23: #{tpu_custom_call.1} parent=1 // pred_check_branch
      %27 = sbr.rel (0) target = $region25
    $region24: #{tpu_custom_call.1} parent=1 // pred_region
      _
    $region25: #{tpu_custom_call.1} parent=1 // pred_fallthru
      _
    // Predicated region
    $region26: #{tpu_custom_call.1} parent=1 // pred_check
      _
    $region27: #{tpu_custom_call.1} parent=1 // pred_check_branch
      %29 = sbr.rel (0) target = $region29
    $region28: #{tpu_custom_call.1} parent=1 // pred_region
      _
    $region29: #{tpu_custom_call.1} parent=1 // pred_fallthru
      _
    // Predicated region
    $region30: #{tpu_custom_call.1} parent=1 // pred_check
      _
    $region31: #{tpu_custom_call.1} parent=1 // pred_check_branch
      %31 = sbr.rel (0) target = $region33
    $region32: #{tpu_custom_call.1} parent=1 // pred_region
      _
    $region33: #{tpu_custom_call.1} parent=1 // pred_fallthru
      _
    // Predicated region
    $region34: #{tpu_custom_call.1} parent=1 // pred_check
      _
    $region35: #{tpu_custom_call.1} parent=1 // pred_check_branch
      %33 = sbr.rel (0) target = $region37
    $region36: #{tpu_custom_call.1} parent=1 // pred_region
      _
    $region37: #{tpu_custom_call.1} parent=1 // pred_fallthru
      _
    // Predicated region
    $region38: #{tpu_custom_call.1} parent=1 // pred_check
      _
    $region39: #{tpu_custom_call.1} parent=1 // pred_check_branch
      %35 = sbr.rel (0) target = $region41
    $region40: #{tpu_custom_call.1} parent=1 // pred_region
      _
    $region41: #{tpu_custom_call.1} parent=1 // pred_fallthru
      _
    %v36 = vld [vmem:[%s0] sm:$0xff]
    %v37 = vld [vmem:[%s0 + $0x8] sm:$0xff]
    %v38 = vld [vmem:[%s1] sm:$0xff]
    %v39 = vld [vmem:[%s1 + $0x8] sm:$0xff]
    %v40 = vld [vmem:[%s2] sm:$0xff]
    %v41 = vld [vmem:[%s8] sm:$0xff]
    %v42 = vld [vmem:[%s8 + $0x8] sm:$0x7]
    %v43 = vld [vmem:[%s9] sm:$0x7]
    %v44 = vld [vmem:[%s3] sm:$0xff]
    %v45 = vld [vmem:[%s3 + $0x8] sm:$0xff]
    %v46 = vld [vmem:[%s3 + $0x10] sm:$0xff]
    %v47 = vld [vmem:[%s3 + $0x18] sm:$0xff]
    %v48 = vld [vmem:[%s3 + $0x20] sm:$0xff]
    %v49 = vld [vmem:[%s3 + $0x28] sm:$0xff]
    %v50 = vld [vmem:[%s3 + $0x30] sm:$0xff]
    %v51 = vld [vmem:[%s3 + $0x38] sm:$0xff]
    %v52 = vld [vmem:[%s3 + $0x40] sm:$0xff]
    %v53 = vld [vmem:[%s3 + $0x48] sm:$0xff]
    %v54 = vld [vmem:[%s3 + $0x50] sm:$0xff]
    %v55 = vld [vmem:[%s3 + $0x58] sm:$0xff]
    %v56 = vld [vmem:[%s3 + $0x60] sm:$0xff]
    %v57 = vld [vmem:[%s3 + $0x68] sm:$0xff]
    %v58 = vld [vmem:[%s3 + $0x70] sm:$0xff]
    %v59 = vld [vmem:[%s3 + $0x78] sm:$0xff]
    %v60 = vld [vmem:[%s3 + $0x80] sm:$0xff]
    %v61 = vld [vmem:[%s3 + $0x88] sm:$0xff]
    %v62 = vld [vmem:[%s3 + $0x90] sm:$0xff]
    %v63 = vld [vmem:[%s3 + $0x98] sm:$0xff]
    %v64 = vld [vmem:[%s3 + $0xa0] sm:$0xff]
    %v65 = vld [vmem:[%s3 + $0xa8] sm:$0xff]
    %v66 = vld [vmem:[%s3 + $0xb0] sm:$0xff]
    %v67 = vld [vmem:[%s3 + $0xb8] sm:$0xff]
    %v68 = vld [vmem:[%s3 + $0xc0] sm:$0xff]
    %v69 = vld [vmem:[%s3 + $0xc8] sm:$0xff]
    %v70 = vld [vmem:[%s3 + $0xd0] sm:$0xff]
    %v71 = vld [vmem:[%s3 + $0xd8] sm:$0xff]
    %v72 = vld [vmem:[%s3 + $0xe0] sm:$0xff]
    %v73 = vld [vmem:[%s3 + $0xe8] sm:$0xff]
    %v74 = vld [vmem:[%s3 + $0xf0] sm:$0xff]
    %v75 = vld [vmem:[%s3 + $0xf8] sm:$0xff]
    %v76 = vlaneseq
    %v77 = vshrl.u32 %v76, 7
    %v78 = vsub.s32 0, %v77
    %v79 = vrot.slane %v41, %v78
    %80 = vmatprep.subr.mxu0 0.0
    %81 = vmatpush1.msra.mxu0 %v44
    %82 = vmatprep.subr.mxu0 0.0
    %83 = vmatpush1.msra.mxu0 %v45
    %84 = vmatprep.subr.mxu0 0.0
    %85 = vmatpush1.msra.mxu0 %v46
    %86 = vmatprep.subr.mxu0 0.0
    %87 = vmatpush1.msra.mxu0 %v47
    %88 = vmatprep.subr.mxu0 0.0
    %89 = vmatpush1.msra.mxu0 %v48
    %90 = vmatprep.subr.mxu0 0.0
    %91 = vmatpush1.msra.mxu0 %v49
    %92 = vmatprep.subr.mxu0 0.0
    %93 = vmatpush1.msra.mxu0 %v50
    %94 = vmatprep.subr.mxu0 0.0
    %95 = vmatpush1.msra.mxu0 %v51
    %96 = vmatprep.subr.mxu0 0.0
    %97 = vmatpush1.msra.mxu0 %v52
    %98 = vmatprep.subr.mxu0 0.0
    %99 = vmatpush1.msra.mxu0 %v53
    %100 = vmatprep.subr.mxu0 0.0
    %101 = vmatpush1.msra.mxu0 %v54
    %102 = vmatprep.subr.mxu0 0.0
    %103 = vmatpush1.msra.mxu0 %v55
    %104 = vmatprep.subr.mxu0 0.0
    %105 = vmatpush1.msra.mxu0 %v56
    %106 = vmatprep.subr.mxu0 0.0
    %107 = vmatpush1.msra.mxu0 %v57
    %108 = vmatprep.subr.mxu0 0.0
    %109 = vmatpush1.msra.mxu0 %v58
    %110 = vmatprep.subr.mxu0 0.0
    %111 = vmatpush1.msra.mxu0 %v59
    %112 = vmatprep.subr.mxu0 0.0
    %113 = vmatpush1.msra.mxu0 %v60
    %114 = vmatprep.subr.mxu0 0.0
    %115 = vmatpush1.msra.mxu0 %v61
    %116 = vmatprep.subr.mxu0 0.0
    %117 = vmatpush1.msra.mxu0 %v62
    %118 = vmatprep.subr.mxu0 0.0
    %119 = vmatpush1.msra.mxu0 %v63
    %120 = vmatprep.subr.mxu0 0.0
    %121 = vmatpush1.msra.mxu0 %v64
    %122 = vmatprep.subr.mxu0 0.0
    %123 = vmatpush1.msra.mxu0 %v65
    %124 = vmatprep.subr.mxu0 0.0
    %125 = vmatpush1.msra.mxu0 %v66
    %126 = vmatprep.subr.mxu0 0.0
    %127 = vmatpush1.msra.mxu0 %v67
    %128 = vmatprep.subr.mxu0 0.0
    %129 = vmatpush1.msra.mxu0 %v68
    %130 = vmatprep.subr.mxu0 0.0
    %131 = vmatpush1.msra.mxu0 %v69
    %132 = vmatprep.subr.mxu0 0.0
    %133 = vmatpush1.msra.mxu0 %v70
    %134 = vmatprep.subr.mxu0 0.0
    %135 = vmatpush1.msra.mxu0 %v71
    %136 = vmatprep.subr.mxu0 0.0
    %137 = vmatpush1.msra.mxu0 %v72
    %138 = vmatprep.subr.mxu0 0.0
    %139 = vmatpush1.msra.mxu0 %v73
    %140 = vmatprep.subr.mxu0 0.0
    %141 = vmatpush1.msra.mxu0 %v74
    %142 = vmatprep.subr.mxu0 0.0
    %143 = vmatpush1.msra.mxu0 %v75
    %144 = vmatprep.mubr.f32.mxu0 %v37
    %145 = vmatmul.mubr.f32.gmra.mrb[0].mxu0 %v36
    %v146 = vpop.f32.mrb[0].mxu0
    %v147 = vadd.f32 %v79, %v146
    %v148 = vpop.f32.mrb[0].mxu0
    %149 = vdwg.mxu0
    %v150 = vtanh.pop %v147
    %v151 = vld [vmem:[%s4] sm:$0xff]
    %v152 = vld [vmem:[%s4 + $0x8] sm:$0xff]
    %v153 = vld [vmem:[%s4 + $0x10] sm:$0xff]
    %v154 = vld [vmem:[%s4 + $0x18] sm:$0xff]
    %v155 = vld [vmem:[%s4 + $0x20] sm:$0xff]
    %v156 = vld [vmem:[%s4 + $0x28] sm:$0xff]
    %v157 = vld [vmem:[%s4 + $0x30] sm:$0xff]
    %v158 = vld [vmem:[%s4 + $0x38] sm:$0xff]
    %vm161 = vcmask 1045504
    %v162 = vrot.slane %v41, 2
    %v163 = vrot.slane %v42, 2
    %v164 = vsel %vm161, %v162, %v163
    %vm166 = vcmask 72704
    %v168 = vsel %vm166, %v38, 0
    %vm170 = vcmask 1040384
    %v171 = vsel %vm170, %v163, 0
    %173 = vmatprep.subr.mxu0 0.0
    %174 = vmatpush1.msra.mxu0 %v164
    %175 = vmatprep.subr.mxu0 0.0
    %176 = vmatpush1.msra.mxu0 %v171
    %177 = vmatprep.subr.mxu0 0.0
    %178 = vmatpush1.msra.mxu0 0.0
    %179 = vmatprep.subr.mxu0 0.0
    %180 = vmatpush1.msra.mxu0 0.0
    %181 = vmatprep.subr.mxu0 0.0
    %182 = vmatpush1.msra.mxu0 0.0
    %183 = vmatprep.subr.mxu0 0.0
    %184 = vmatpush1.msra.mxu0 0.0
    %185 = vmatprep.subr.mxu0 0.0
    %186 = vmatpush1.msra.mxu0 0.0
    %187 = vmatprep.subr.mxu0 0.0
    %188 = vmatpush1.msra.mxu0 0.0
    %189 = vmatprep.subr.mxu0 0.0
    %190 = vmatpush1.msra.mxu0 0.0
    %191 = vmatprep.subr.mxu0 0.0
    %192 = vmatpush1.msra.mxu0 0.0
    %193 = vmatprep.subr.mxu0 0.0
    %194 = vmatpush1.msra.mxu0 0.0
    %195 = vmatprep.subr.mxu0 0.0
    %196 = vmatpush1.msra.mxu0 0.0
    %197 = vmatprep.subr.mxu0 0.0
    %198 = vmatpush1.msra.mxu0 0.0
    %199 = vmatprep.subr.mxu0 0.0
    %200 = vmatpush1.msra.mxu0 0.0
    %201 = vmatprep.subr.mxu0 0.0
    %202 = vmatpush1.msra.mxu0 0.0
    %203 = vmatprep.subr.mxu0 0.0
    %204 = vmatpush1.msra.mxu0 0.0
    %205 = vmatprep.subr.mxu0 0.0
    %206 = vmatpush1.msra.mxu0 0.0
    %207 = vmatprep.subr.mxu0 0.0
    %208 = vmatpush1.msra.mxu0 0.0
    %209 = vmatprep.subr.mxu0 0.0
    %210 = vmatpush1.msra.mxu0 0.0
    %211 = vmatprep.subr.mxu0 0.0
    %212 = vmatpush1.msra.mxu0 0.0
    %213 = vmatprep.subr.mxu0 0.0
    %214 = vmatpush1.msra.mxu0 0.0
    %215 = vmatprep.subr.mxu0 0.0
    %216 = vmatpush1.msra.mxu0 0.0
    %217 = vmatprep.subr.mxu0 0.0
    %218 = vmatpush1.msra.mxu0 0.0
    %219 = vmatprep.subr.mxu0 0.0
    %220 = vmatpush1.msra.mxu0 0.0
    %221 = vmatprep.subr.mxu0 0.0
    %222 = vmatpush1.msra.mxu0 0.0
    %223 = vmatprep.subr.mxu0 0.0
    %224 = vmatpush1.msra.mxu0 0.0
    %225 = vmatprep.subr.mxu0 0.0
    %226 = vmatpush1.msra.mxu0 0.0
    %227 = vmatprep.subr.mxu0 0.0
    %228 = vmatpush1.msra.mxu0 0.0
    %229 = vmatprep.subr.mxu0 0.0
    %230 = vmatpush1.msra.mxu0 0.0
    %231 = vmatprep.subr.mxu0 0.0
    %232 = vmatpush1.msra.mxu0 0.0
    %233 = vmatprep.subr.mxu0 0.0
    %234 = vmatpush1.msra.mxu0 0.0
    %235 = vmatprep.subr.mxu0 0.0
    %236 = vmatpush1.msra.mxu0 0.0
    %237 = vmatprep.mubr.f32.mxu0 0.0
    %238 = vmatmul.mubr.f32.gmra.mrb[0].mxu0 %v168
    %v239 = vpop.f32.mrb[0].mxu0
    %v240 = vadd.f32 0.0, %v239
    %v241 = vpop.f32.mrb[0].mxu0
    %242 = vdwg.mxu0
    %vm243 = vcmask 523264
    %v245 = vsel %vm243, %v150, 0
    %247 = vmatprep.subr.mxu0 0.0
    %248 = vmatpush1.msra.mxu0 %v151
    %249 = vmatprep.subr.mxu0 0.0
    %250 = vmatpush1.msra.mxu0 %v152
    %251 = vmatprep.subr.mxu0 0.0
    %252 = vmatpush1.msra.mxu0 %v153
    %253 = vmatprep.subr.mxu0 0.0
    %254 = vmatpush1.msra.mxu0 %v154
    %255 = vmatprep.subr.mxu0 0.0
    %256 = vmatpush1.msra.mxu0 %v155
    %257 = vmatprep.subr.mxu0 0.0
    %258 = vmatpush1.msra.mxu0 %v156
    %259 = vmatprep.subr.mxu0 0.0
    %260 = vmatpush1.msra.mxu0 %v157
    %261 = vmatprep.subr.mxu0 0.0
    %262 = vmatpush1.msra.mxu0 %v158
    %263 = vmatprep.subr.mxu0 0.0
    %264 = vmatpush1.msra.mxu0 0.0
    %265 = vmatprep.subr.mxu0 0.0
    %266 = vmatpush1.msra.mxu0 0.0
    %267 = vmatprep.subr.mxu0 0.0
    %268 = vmatpush1.msra.mxu0 0.0
    %269 = vmatprep.subr.mxu0 0.0
    %270 = vmatpush1.msra.mxu0 0.0
    %271 = vmatprep.subr.mxu0 0.0
    %272 = vmatpush1.msra.mxu0 0.0
    %273 = vmatprep.subr.mxu0 0.0
    %274 = vmatpush1.msra.mxu0 0.0
    %275 = vmatprep.subr.mxu0 0.0
    %276 = vmatpush1.msra.mxu0 0.0
    %277 = vmatprep.subr.mxu0 0.0
    %278 = vmatpush1.msra.mxu0 0.0
    %279 = vmatprep.subr.mxu0 0.0
    %280 = vmatpush1.msra.mxu0 0.0
    %281 = vmatprep.subr.mxu0 0.0
    %282 = vmatpush1.msra.mxu0 0.0
    %283 = vmatprep.subr.mxu0 0.0
    %284 = vmatpush1.msra.mxu0 0.0
    %285 = vmatprep.subr.mxu0 0.0
    %286 = vmatpush1.msra.mxu0 0.0
    %287 = vmatprep.subr.mxu0 0.0
    %288 = vmatpush1.msra.mxu0 0.0
    %289 = vmatprep.subr.mxu0 0.0
    %290 = vmatpush1.msra.mxu0 0.0
    %291 = vmatprep.subr.mxu0 0.0
    %292 = vmatpush1.msra.mxu0 0.0
    %293 = vmatprep.subr.mxu0 0.0
    %294 = vmatpush1.msra.mxu0 0.0
    %295 = vmatprep.subr.mxu0 0.0
    %296 = vmatpush1.msra.mxu0 0.0
    %297 = vmatprep.subr.mxu0 0.0
    %298 = vmatpush1.msra.mxu0 0.0
    %299 = vmatprep.subr.mxu0 0.0
    %300 = vmatpush1.msra.mxu0 0.0
    %301 = vmatprep.subr.mxu0 0.0
    %302 = vmatpush1.msra.mxu0 0.0
    %303 = vmatprep.subr.mxu0 0.0
    %304 = vmatpush1.msra.mxu0 0.0
    %305 = vmatprep.subr.mxu0 0.0
    %306 = vmatpush1.msra.mxu0 0.0
    %307 = vmatprep.subr.mxu0 0.0
    %308 = vmatpush1.msra.mxu0 0.0
    %309 = vmatprep.subr.mxu0 0.0
    %310 = vmatpush1.msra.mxu0 0.0
    %311 = vmatprep.mubr.f32.mxu0 0.0
    %312 = vmatmul.mubr.f32.gmra.mrb[0].mxu0 %v245
    %v313 = vpop.f32.mrb[0].mxu0
    %v314 = vadd.f32 %v240, %v313
    %v315 = vpop.f32.mrb[0].mxu0
    %316 = vdwg.mxu0
    %v317 = vlaneseq
    %v318 = vshrl.u32 %v317, 7
    %v319 = vsub.s32 1, %v318
    %v320 = vrot.slane %v41, %v319
    %v321 = vadd.f32 %v314, %v320
    %vm322 = vcmp.gt.f32.partialorder %v321, 20.0
    %v323 = vmin.f32 %v321, 20.0
    %v324 = vmul.f32 %v323, 1.442695
    %v325 = vpow.pop %v324
    %v326 = vadd.f32 %v325, 1.0
    %v327 = vlog2.pop %v326
    %v328 = vmul.f32 %v327, 0.6931472
    %v329 = vmul.f32 -0.5, %v325
    %v330 = vadd.f32 %v329, 1.0
    %v331 = vmul.f32 %v330, %v325
    %v332 = vand.u32 2147483647, %v325
    %vm333 = vcmp.lt.f32.partialorder %v332, 0.0004427343
    %v334 = vsel %vm333, %v331, %v328
    %v335 = vsel %vm322, %v321, %v334
    %v336 = vld [vmem:[%s5] sm:$0xff]
    %v337 = vld [vmem:[%s5 + $0x8] sm:$0xff]
    %v338 = vld [vmem:[%s5 + $0x10] sm:$0xff]
    %v339 = vld [vmem:[%s5 + $0x18] sm:$0xff]
    %v340 = vld [vmem:[%s5 + $0x20] sm:$0xff]
    %v341 = vld [vmem:[%s5 + $0x28] sm:$0xff]
    %v342 = vld [vmem:[%s5 + $0x30] sm:$0xff]
    %v343 = vld [vmem:[%s5 + $0x38] sm:$0xff]
    %v344 = vlaneseq
    %v345 = vshrl.u32 %v344, 7
    %v346 = vsub.s32 0, %v345
    %v347 = vrot.slane %v43, %v346
    %v349 = vsel %vm243, %v335, 0
    %351 = vmatprep.subr.mxu0 0.0
    %352 = vmatpush1.msra.mxu0 %v336
    %353 = vmatprep.subr.mxu0 0.0
    %354 = vmatpush1.msra.mxu0 %v337
    %355 = vmatprep.subr.mxu0 0.0
    %356 = vmatpush1.msra.mxu0 %v338
    %357 = vmatprep.subr.mxu0 0.0
    %358 = vmatpush1.msra.mxu0 %v339
    %359 = vmatprep.subr.mxu0 0.0
    %360 = vmatpush1.msra.mxu0 %v340
    %361 = vmatprep.subr.mxu0 0.0
    %362 = vmatpush1.msra.mxu0 %v341
    %363 = vmatprep.subr.mxu0 0.0
    %364 = vmatpush1.msra.mxu0 %v342
    %365 = vmatprep.subr.mxu0 0.0
    %366 = vmatpush1.msra.mxu0 %v343
    %367 = vmatprep.subr.mxu0 0.0
    %368 = vmatpush1.msra.mxu0 0.0
    %369 = vmatprep.subr.mxu0 0.0
    %370 = vmatpush1.msra.mxu0 0.0
    %371 = vmatprep.subr.mxu0 0.0
    %372 = vmatpush1.msra.mxu0 0.0
    %373 = vmatprep.subr.mxu0 0.0
    %374 = vmatpush1.msra.mxu0 0.0
    %375 = vmatprep.subr.mxu0 0.0
    %376 = vmatpush1.msra.mxu0 0.0
    %377 = vmatprep.subr.mxu0 0.0
    %378 = vmatpush1.msra.mxu0 0.0
    %379 = vmatprep.subr.mxu0 0.0
    %380 = vmatpush1.msra.mxu0 0.0
    %381 = vmatprep.subr.mxu0 0.0
    %382 = vmatpush1.msra.mxu0 0.0
    %383 = vmatprep.subr.mxu0 0.0
    %384 = vmatpush1.msra.mxu0 0.0
    %385 = vmatprep.subr.mxu0 0.0
    %386 = vmatpush1.msra.mxu0 0.0
    %387 = vmatprep.subr.mxu0 0.0
    %388 = vmatpush1.msra.mxu0 0.0
    %389 = vmatprep.subr.mxu0 0.0
    %390 = vmatpush1.msra.mxu0 0.0
    %391 = vmatprep.subr.mxu0 0.0
    %392 = vmatpush1.msra.mxu0 0.0
    %393 = vmatprep.subr.mxu0 0.0
    %394 = vmatpush1.msra.mxu0 0.0
    %395 = vmatprep.subr.mxu0 0.0
    %396 = vmatpush1.msra.mxu0 0.0
    %397 = vmatprep.subr.mxu0 0.0
    %398 = vmatpush1.msra.mxu0 0.0
    %399 = vmatprep.subr.mxu0 0.0
    %400 = vmatpush1.msra.mxu0 0.0
    %401 = vmatprep.subr.mxu0 0.0
    %402 = vmatpush1.msra.mxu0 0.0
    %403 = vmatprep.subr.mxu0 0.0
    %404 = vmatpush1.msra.mxu0 0.0
    %405 = vmatprep.subr.mxu0 0.0
    %406 = vmatpush1.msra.mxu0 0.0
    %407 = vmatprep.subr.mxu0 0.0
    %408 = vmatpush1.msra.mxu0 0.0
    %409 = vmatprep.subr.mxu0 0.0
    %410 = vmatpush1.msra.mxu0 0.0
    %411 = vmatprep.subr.mxu0 0.0
    %412 = vmatpush1.msra.mxu0 0.0
    %413 = vmatprep.subr.mxu0 0.0
    %414 = vmatpush1.msra.mxu0 0.0
    %415 = vmatprep.mubr.f32.mxu0 0.0
    %416 = vmatmul.mubr.f32.gmra.mrb[0].mxu0 %v349
    %v417 = vpop.f32.mrb[0].mxu0
    %v418 = vadd.f32 %v347, %v417
    %v419 = vpop.f32.mrb[0].mxu0
    %420 = vdwg.mxu0
    %vm421 = vcmask 261120
    %v422 = vsel %vm421, %v418, 0.0
    %v423 = vrot.slane %v422, 4
    %v424 = vadd.f32 %v422, %v423
    %v425 = vrot.slane %v424, 2
    %v426 = vadd.f32 %v424, %v425
    %v427 = vrot.slane %v426, 1
    %v428 = vadd.f32 %v426, %v427
    %v429 = vrcp.pop 8.0
    %v430 = vmul.f32 %v428, %v429
    %v431 = vsub.f32 %v418, %v430
    %v432 = vmul.f32 %v431, %v431
    %v433 = vsel %vm421, %v432, 0.0
    %v434 = vrot.slane %v433, 4
    %v435 = vadd.f32 %v433, %v434
    %v436 = vrot.slane %v435, 2
    %v437 = vadd.f32 %v435, %v436
    %v438 = vrot.slane %v437, 1
    %v439 = vadd.f32 %v437, %v438
    %v440 = vmul.f32 %v439, %v429
    %v441 = vlaneseq
    %v442 = vshrl.u32 %v441, 7
    %v443 = vsub.s32 1, %v442
    %v444 = vrot.slane %v43, %v443
    %v445 = vmul.f32 %v444, %v431
    %v446 = vadd.f32 %v440, 0.001
    %v447 = vrsqrt.pop %v446
    %v448 = vmul.f32 %v445, %v447
    %v449 = vlaneseq
    %v450 = vshrl.u32 %v449, 7
    %v451 = vsub.s32 2, %v450
    %v452 = vrot.slane %v43, %v451
    %v453 = vadd.f32 %v448, %v452
    %v454 = vmul.f32 %v453, 0.5
    %v455 = vmul.f32 %v454, 1.442695
    %v456 = vpow.pop %v455
    %458 = vrot.lane.b32.xlu0 %v40, 16
    %v459 = vpop.permute.xlu0 %458
    %v461 = vmul.f32 %v456, %v459
    %463 = vrot.lane.b32.xlu0 %v461, 112
    %v464 = vpop.permute.xlu0 %463
    %v466 = vadd.f32 %v453, %v464
    %v467 = vmul.f32 %v456, %v456
    %v468 = vmul.f32 %v453, %v453
    %470 = vrot.lane.b32.xlu0 %v468, 16
    %v471 = vpop.permute.xlu0 %470
    %v473 = vadd.f32 %v467, %v471
    %v474 = vmul.f32 %v473, 1.1377778
    %v475 = vadd.f32 %v474, -0.12907705
    %v476 = vsub.f32 %v475, %v453
    %478 = vrot.lane.b32.xlu0 %v476, 112
    %v479 = vpop.permute.xlu0 %478
    %vm481 = vcmask 130048
    %v482 = vsel %vm481, %v479, 0.0
    %483 = vadd.xlane.f32.xlu0 %v482
    %v484 = vpop.xlane.xlu0 %483
    %v485 = vsub.f32 %v484, 16.0
    %v486 = vmul.f32 %v485, 0.5
    %v487 = vsel %vm481, %v466, -inf
    %488 = vmax.xlane.f32.xlu0 %v487
    %v489 = vpop.xlane.xlu0 %488
    %v490 = vsub.f32 %v466, %v489
    %v491 = vmul.f32 %v490, 1.442695
    %v492 = vpow.pop %v491
    %v493 = vsel %vm481, %v492, 0.0
    %494 = vadd.xlane.f32.xlu0 %v493
    %v495 = vpop.xlane.xlu0 %494
    %v496 = vrcp.pop %v495
    %v497 = vmul.f32 %v492, %v496
    %v498 = vld [vmem:[%s6] sm:$0xff]
    %v499 = vld [vmem:[%s6 + $0x8] sm:$0xff]
    %v500 = vld [vmem:[%s6 + $0x10] sm:$0xff]
    %v501 = vld [vmem:[%s6 + $0x18] sm:$0xff]
    %v502 = vlaneseq
    %v503 = vand.u32 %v502, 127
    %v504 = vadd.s32 %v503, 128
    %vm505 = vcmp.lt.s32.totalorder %v503, 9
    %vm506 = vcmp.lt.s32.totalorder %v504, 9
    %v507 = vsel %vm505, 1.0, 0.0
    %v508 = vsel %vm506, 1.0, 0.0
    %v510 = vsel %vm481, %v497, 0
    %512 = vmatprep.subr.mxu0 %v499
    %513 = vmatpush1.msra.mxu0 %v498
    %514 = vmatprep.subr.mxu0 %v501
    %515 = vmatpush1.msra.mxu0 %v500
    %516 = vmatprep.subr.mxu0 0.0
    %517 = vmatpush1.msra.mxu0 0.0
    %518 = vmatprep.subr.mxu0 0.0
    %519 = vmatpush1.msra.mxu0 0.0
    %520 = vmatprep.subr.mxu0 0.0
    %521 = vmatpush1.msra.mxu0 0.0
    %522 = vmatprep.subr.mxu0 0.0
    %523 = vmatpush1.msra.mxu0 0.0
    %524 = vmatprep.subr.mxu0 0.0
    %525 = vmatpush1.msra.mxu0 0.0
    %526 = vmatprep.subr.mxu0 0.0
    %527 = vmatpush1.msra.mxu0 0.0
    %528 = vmatprep.subr.mxu0 0.0
    %529 = vmatpush1.msra.mxu0 0.0
    %530 = vmatprep.subr.mxu0 0.0
    %531 = vmatpush1.msra.mxu0 0.0
    %532 = vmatprep.subr.mxu0 0.0
    %533 = vmatpush1.msra.mxu0 0.0
    %534 = vmatprep.subr.mxu0 0.0
    %535 = vmatpush1.msra.mxu0 0.0
    %536 = vmatprep.subr.mxu0 0.0
    %537 = vmatpush1.msra.mxu0 0.0
    %538 = vmatprep.subr.mxu0 0.0
    %539 = vmatpush1.msra.mxu0 0.0
    %540 = vmatprep.subr.mxu0 0.0
    %541 = vmatpush1.msra.mxu0 0.0
    %542 = vmatprep.subr.mxu0 0.0
    %543 = vmatpush1.msra.mxu0 0.0
    %544 = vmatprep.subr.mxu0 0.0
    %545 = vmatpush1.msra.mxu0 0.0
    %546 = vmatprep.subr.mxu0 0.0
    %547 = vmatpush1.msra.mxu0 0.0
    %548 = vmatprep.subr.mxu0 0.0
    %549 = vmatpush1.msra.mxu0 0.0
    %550 = vmatprep.subr.mxu0 0.0
    %551 = vmatpush1.msra.mxu0 0.0
    %552 = vmatprep.subr.mxu0 0.0
    %553 = vmatpush1.msra.mxu0 0.0
    %554 = vmatprep.subr.mxu0 0.0
    %555 = vmatpush1.msra.mxu0 0.0
    %556 = vmatprep.subr.mxu0 0.0
    %557 = vmatpush1.msra.mxu0 0.0
    %558 = vmatprep.subr.mxu0 0.0
    %559 = vmatpush1.msra.mxu0 0.0
    %560 = vmatprep.subr.mxu0 0.0
    %561 = vmatpush1.msra.mxu0 0.0
    %562 = vmatprep.subr.mxu0 0.0
    %563 = vmatpush1.msra.mxu0 0.0
    %564 = vmatprep.subr.mxu0 0.0
    %565 = vmatpush1.msra.mxu0 0.0
    %566 = vmatprep.subr.mxu0 0.0
    %567 = vmatpush1.msra.mxu0 0.0
    %568 = vmatprep.subr.mxu0 0.0
    %569 = vmatpush1.msra.mxu0 0.0
    %570 = vmatprep.subr.mxu0 0.0
    %571 = vmatpush1.msra.mxu0 0.0
    %572 = vmatprep.subr.mxu0 0.0
    %573 = vmatpush1.msra.mxu0 0.0
    %574 = vmatprep.subr.mxu0 0.0
    %575 = vmatpush1.msra.mxu0 0.0
    %576 = vmatprep.mubr.f32.mxu0 0.0
    %577 = vmatmul.mubr.f32.gmra.mrb[0].mxu0 %v510
    %v578 = vpop.f32.mrb[0].mxu0
    %v579 = vadd.f32 %v507, %v578
    %v580 = vpop.f32.mrb[0].mxu0
    %v581 = vadd.f32 %v508, %v580
    %582 = vdwg.mxu0
    %v583 = vmul.f32 %v38, %v579
    %v584 = vmul.f32 %v39, %v581
    %v585 = vld [vmem:[%s7] sm:$0xff]
    %v586 = vld [vmem:[%s7 + $0x8] sm:$0xff]
    %v587 = vld [vmem:[%s7 + $0x10] sm:$0xff]
    %v588 = vld [vmem:[%s7 + $0x18] sm:$0xff]
    %v589 = vld [vmem:[%s7 + $0x20] sm:$0xff]
    %v590 = vld [vmem:[%s7 + $0x28] sm:$0xff]
    %v591 = vld [vmem:[%s7 + $0x30] sm:$0xff]
    %v592 = vld [vmem:[%s7 + $0x38] sm:$0xff]
    %v593 = vld [vmem:[%s7 + $0x40] sm:$0xff]
    %v594 = vld [vmem:[%s7 + $0x48] sm:$0xff]
    %v595 = vld [vmem:[%s7 + $0x50] sm:$0xff]
    %v596 = vld [vmem:[%s7 + $0x58] sm:$0xff]
    %v597 = vld [vmem:[%s7 + $0x60] sm:$0xff]
    %v598 = vld [vmem:[%s7 + $0x68] sm:$0xff]
    %v599 = vld [vmem:[%s7 + $0x70] sm:$0xff]
    %v600 = vld [vmem:[%s7 + $0x78] sm:$0xff]
    %v601 = vld [vmem:[%s7 + $0x80] sm:$0xff]
    %v602 = vld [vmem:[%s7 + $0x88] sm:$0xff]
    %v603 = vld [vmem:[%s7 + $0x90] sm:$0xff]
    %v604 = vld [vmem:[%s7 + $0x98] sm:$0xff]
    %v605 = vld [vmem:[%s7 + $0xa0] sm:$0xff]
    %v606 = vld [vmem:[%s7 + $0xa8] sm:$0xff]
    %v607 = vld [vmem:[%s7 + $0xb0] sm:$0xff]
    %v608 = vld [vmem:[%s7 + $0xb8] sm:$0xff]
    %v609 = vld [vmem:[%s7 + $0xc0] sm:$0xff]
    %v610 = vld [vmem:[%s7 + $0xc8] sm:$0xff]
    %v611 = vld [vmem:[%s7 + $0xd0] sm:$0xff]
    %v612 = vld [vmem:[%s7 + $0xd8] sm:$0xff]
    %v613 = vld [vmem:[%s7 + $0xe0] sm:$0xff]
    %v614 = vld [vmem:[%s7 + $0xe8] sm:$0xff]
    %v615 = vld [vmem:[%s7 + $0xf0] sm:$0xff]
    %v616 = vld [vmem:[%s7 + $0xf8] sm:$0xff]
    %v617 = vld [vmem:[%s7 + $0x100] sm:$0xff]
    %v618 = vld [vmem:[%s7 + $0x108] sm:$0xff]
    %v619 = vld [vmem:[%s7 + $0x110] sm:$0xff]
    %v620 = vld [vmem:[%s7 + $0x118] sm:$0xff]
    %v621 = vld [vmem:[%s7 + $0x120] sm:$0xff]
    %v622 = vld [vmem:[%s7 + $0x128] sm:$0xff]
    %v623 = vld [vmem:[%s7 + $0x130] sm:$0x1]
    %v624 = vld [vmem:[%s7 + $0x138] sm:$0x1]
    %vm625 = vcmask 203776
    %v627 = vsel %vm625, %v584, 0
    %v630 = vsel %vm170, %v623, 0
    %v633 = vsel %vm170, %v624, 0
    %635 = vmatprep.subr.mxu0 %v586
    %636 = vmatpush1.msra.mxu0 %v585
    %637 = vmatprep.subr.mxu0 %v588
    %638 = vmatpush1.msra.mxu0 %v587
    %639 = vmatprep.subr.mxu0 %v590
    %640 = vmatpush1.msra.mxu0 %v589
    %641 = vmatprep.subr.mxu0 %v592
    %642 = vmatpush1.msra.mxu0 %v591
    %643 = vmatprep.subr.mxu0 %v594
    %644 = vmatpush1.msra.mxu0 %v593
    %645 = vmatprep.subr.mxu0 %v596
    %646 = vmatpush1.msra.mxu0 %v595
    %647 = vmatprep.subr.mxu0 %v598
    %648 = vmatpush1.msra.mxu0 %v597
    %649 = vmatprep.subr.mxu0 %v600
    %650 = vmatpush1.msra.mxu0 %v599
    %651 = vmatprep.subr.mxu0 %v602
    %652 = vmatpush1.msra.mxu0 %v601
    %653 = vmatprep.subr.mxu0 %v604
    %654 = vmatpush1.msra.mxu0 %v603
    %655 = vmatprep.subr.mxu0 %v606
    %656 = vmatpush1.msra.mxu0 %v605
    %657 = vmatprep.subr.mxu0 %v608
    %658 = vmatpush1.msra.mxu0 %v607
    %659 = vmatprep.subr.mxu0 %v610
    %660 = vmatpush1.msra.mxu0 %v609
    %661 = vmatprep.subr.mxu0 %v612
    %662 = vmatpush1.msra.mxu0 %v611
    %663 = vmatprep.subr.mxu0 %v614
    %664 = vmatpush1.msra.mxu0 %v613
    %665 = vmatprep.subr.mxu0 %v616
    %666 = vmatpush1.msra.mxu0 %v615
    %667 = vmatprep.subr.mxu0 %v618
    %668 = vmatpush1.msra.mxu0 %v617
    %669 = vmatprep.subr.mxu0 %v620
    %670 = vmatpush1.msra.mxu0 %v619
    %671 = vmatprep.subr.mxu0 %v622
    %672 = vmatpush1.msra.mxu0 %v621
    %673 = vmatprep.subr.mxu0 %v633
    %674 = vmatpush1.msra.mxu0 %v630
    %675 = vmatprep.subr.mxu0 0.0
    %676 = vmatpush1.msra.mxu0 0.0
    %677 = vmatprep.subr.mxu0 0.0
    %678 = vmatpush1.msra.mxu0 0.0
    %679 = vmatprep.subr.mxu0 0.0
    %680 = vmatpush1.msra.mxu0 0.0
    %681 = vmatprep.subr.mxu0 0.0
    %682 = vmatpush1.msra.mxu0 0.0
    %683 = vmatprep.subr.mxu0 0.0
    %684 = vmatpush1.msra.mxu0 0.0
    %685 = vmatprep.subr.mxu0 0.0
    %686 = vmatpush1.msra.mxu0 0.0
    %687 = vmatprep.subr.mxu0 0.0
    %688 = vmatpush1.msra.mxu0 0.0
    %689 = vmatprep.subr.mxu0 0.0
    %690 = vmatpush1.msra.mxu0 0.0
    %691 = vmatprep.subr.mxu0 0.0
    %692 = vmatpush1.msra.mxu0 0.0
    %693 = vmatprep.subr.mxu0 0.0
    %694 = vmatpush1.msra.mxu0 0.0
    %695 = vmatprep.subr.mxu0 0.0
    %696 = vmatpush1.msra.mxu0 0.0
    %697 = vmatprep.subr.mxu0 0.0
    %698 = vmatpush1.msra.mxu0 0.0
    %699 = vmatprep.mubr.f32.mxu0 %v627
    %700 = vmatmul.mubr.f32.gmra.mrb[0].mxu0 %v583
    %v701 = vpop.f32.mrb[0].mxu0
    %v702 = vadd.f32 0.0, %v701
    %v703 = vpop.f32.mrb[0].mxu0
    %v704 = vadd.f32 0.0, %v703
    %705 = vdwg.mxu0
    %v706 = vmax.f32 %v702, %v704
    %707 = vmax.xlane.f32.xlu0 %v706
    %v708 = vpop.xlane.xlu0 %707
    %v709 = vsub.f32 %v702, %v708
    %v710 = vsub.f32 %v704, %v708
    %v711 = vmul.f32 %v709, 1.442695
    %v712 = vpow.pop %v711
    %v713 = vmul.f32 %v710, 1.442695
    %v714 = vpow.pop %v713
    %v715 = vadd.f32 %v712, %v714
    %716 = vadd.xlane.f32.xlu0 %v715
    %v717 = vpop.xlane.xlu0 %716
    %v718 = vlog2.pop %v717
    %v719 = vmul.f32 %v718, 0.6931472
    %v720 = vadd.f32 %v36, %v37
    %721 = vadd.xlane.f32.xlu0 %v720
    %v722 = vpop.xlane.xlu0 %721
    %v723 = vmul.f32 %v719, %v722
    %v724 = vmul.f32 %v36, %v709
    %v725 = vmul.f32 %v37, %v710
    %v726 = vadd.f32 %v724, %v725
    %727 = vadd.xlane.f32.xlu0 %v726
    %v728 = vpop.xlane.xlu0 %727
    %v729 = vsub.f32 %v723, %v728
    %vm730 = vcmp.eq.s32.totalorder %v503, 0
    %vm731 = vcmp.eq.s32.totalorder %v503, 1
    %v732 = vsel %vm731, %v729, 0.0
    %v733 = vsel %vm730, %v486, %v732
    %734 = vst [vmem:[#allocation2] sm:$0xff] %v733
    // Predicated region
    $region42: #{tpu_custom_call.1} parent=1 // pred_check
      _
    $region43: #{tpu_custom_call.1} parent=1 // pred_check_branch
      %736 = sbr.rel (0) target = $region45
    $region44: #{tpu_custom_call.1} parent=1 // pred_region
      %s738 = ssub.s32 128, 128
      %739 = vsyncadd [#allocation3], %s738
      %s741 = sshll.u32 [#allocation2], 4
      %s742 = int_to_ptr.vmem [resolvable:$true] %s741
      %744 = dma.vmem_to_hbm [thread:$0]  %s742, 128, %s10, [#allocation3]
    $region45: #{tpu_custom_call.1} parent=1 // pred_fallthru
      _
    // Predicated region
    $region46: #{tpu_custom_call.1} parent=1 // pred_check
      _
    $region47: #{tpu_custom_call.1} parent=1 // pred_check_branch
      %746 = sbr.rel (0) target = $region49
    $region48: #{tpu_custom_call.1} parent=1 // pred_region
      %747 = dma.done [#allocation3], 128
    $region49: #{tpu_custom_call.1} parent=1 // pred_fallthru
      _
    %748 = vsyncpa [#allocation3], 1

</llo_original>
